<compile_context>
chip_gen: v7x
topology: tpu7x:2x2x1
jax: 0.10.0
libtpu: 0.0.40
codegen_flags: <defaults>
</compile_context>

<pallas_src>
import functools

import jax
import jax.numpy as jnp
from jax.experimental import pallas as pl
from jax.experimental.pallas import tpu as pltpu

C = 3  # number of classes, fixed by `.view(-1, 3)` in the PyTorch module


def _cdiv(a, b):
    return (a + b - 1) // b


def _ce_kernel_masked(pred_ref, label_ref, mask_ref, sum_ref, cnt_ref,
                      acc_sc, cnt_sc, *, total_rows, tb):
    i = pl.program_id(0)

    @pl.when(i == 0)
    def _():
        acc_sc[...] = jnp.zeros_like(acc_sc)
        cnt_sc[...] = jnp.zeros_like(cnt_sc)

    x = pred_ref[...].astype(jnp.float32)     # (3, TB, 128) logits
    p = label_ref[...].astype(jnp.float32)    # (3, TB, 128) soft targets
    m = mask_ref[...].astype(jnp.float32)     # (TB, 128) row mask (1.0 = keep)

    x0, x1, x2 = x[0], x[1], x[2]
    p0, p1, p2 = p[0], p[1], p[2]

    # numerically stable per-row log-sum-exp (class axis = leading dim -> all
    # ops below are fully dense (TB,128) VPU/EUP ops, no cross-lane work)
    rmax = jnp.maximum(jnp.maximum(x0, x1), x2)
    sexp = jnp.exp(x0 - rmax) + jnp.exp(x1 - rmax) + jnp.exp(x2 - rmax)
    lse = jnp.log(sexp) + rmax
    psum = p0 + p1 + p2
    pdot = p0 * x0 + p1 * x1 + p2 * x2

    # ragged-tail validity: row index of element [s, l] in this block
    sb = jax.lax.broadcasted_iota(jnp.int32, (tb, 128), 0) + i * tb
    ln = jax.lax.broadcasted_iota(jnp.int32, (tb, 128), 1)
    valid = sb * 128 + ln < total_rows

    loss_row = m * (lse * psum - pdot)
    # jnp.where (select) so garbage in partial blocks can never poison the sum
    acc_sc[...] += jnp.where(valid, loss_row, 0.0)
    cnt_sc[...] += jnp.where(valid, m, 0.0)

    @pl.when(i == pl.num_programs(0) - 1)
    def _():
        # single cross-lane reduce, off the hot path
        sum_ref[...] = jnp.full(sum_ref.shape, jnp.sum(acc_sc[...]), sum_ref.dtype)
        cnt_ref[...] = jnp.full(cnt_ref.shape, jnp.sum(cnt_sc[...]), cnt_ref.dtype)


def _ce_kernel_unmasked(pred_ref, label_ref, sum_ref, acc_sc, *, total_rows, tb):
    i = pl.program_id(0)

    @pl.when(i == 0)
    def _():
        acc_sc[...] = jnp.zeros_like(acc_sc)

    x = pred_ref[...].astype(jnp.float32)
    p = label_ref[...].astype(jnp.float32)

    x0, x1, x2 = x[0], x[1], x[2]
    p0, p1, p2 = p[0], p[1], p[2]

    rmax = jnp.maximum(jnp.maximum(x0, x1), x2)
    sexp = jnp.exp(x0 - rmax) + jnp.exp(x1 - rmax) + jnp.exp(x2 - rmax)
    lse = jnp.log(sexp) + rmax
    psum = p0 + p1 + p2
    pdot = p0 * x0 + p1 * x1 + p2 * x2

    sb = jax.lax.broadcasted_iota(jnp.int32, (tb, 128), 0) + i * tb
    ln = jax.lax.broadcasted_iota(jnp.int32, (tb, 128), 1)
    valid = sb * 128 + ln < total_rows

    acc_sc[...] += jnp.where(valid, lse * psum - pdot, 0.0)

    @pl.when(i == pl.num_programs(0) - 1)
    def _():
        sum_ref[...] = jnp.full(sum_ref.shape, jnp.sum(acc_sc[...]), sum_ref.dtype)


def per_level_cross_entropy_loss(pred, label, have_label=None, block_sublanes=1024):
    """Pallas-backed equivalent of PerLevelCrossEntropyLoss.forward (weight=None)."""
    pred2 = pred.reshape(-1, C)      # original dtype preserved (no wrapper upcast)
    label2 = label.reshape(-1, C)
    r = pred2.shape[0]

    nb = _cdiv(r, 128)               # number of 128-row lane blocks
    r128 = nb * 128

    # Single wrapper-side copy per tensor: the (R,3)->(3,R) transpose.  The
    # alignment pad (<128 rows) only exists when R % 128 != 0; all tile-level
    # padding is replaced by the in-kernel validity mask.
    pred_t = pred2.T                 # (C, R)
    label_t = label2.T
    if r128 != r:
        pad = r128 - r
        pred_t = jnp.pad(pred_t, ((0, 0), (0, pad)))
        label_t = jnp.pad(label_t, ((0, 0), (0, pad)))
    pred_t = pred_t.reshape(C, nb, 128)      # free, contiguous reshape
    label_t = label_t.reshape(C, nb, 128)

    # sublane-block tile: multiple of 32 (covers f32/bf16/int8 tiling) unless
    # it spans the whole axis.  Default 1024 -> 131072 rows / step.
    tb = max(32, (int(block_sublanes) // 32) * 32)
    if tb >= nb:
        tb = nb
    steps = _cdiv(nb, tb)

    out_struct = jax.ShapeDtypeStruct((8, 128), jnp.float32)
    out_spec = pl.BlockSpec((8, 128), lambda i: (0, 0))
    data_spec = pl.BlockSpec((C, tb, 128), lambda i: (0, i, 0))
    compiler_params = pltpu.CompilerParams(dimension_semantics=("arbitrary",))

    if have_label is None:
        kernel = functools.partial(_ce_kernel_unmasked, total_rows=r, tb=tb)
        sums = pl.pallas_call(
            kernel,
            out_shape=out_struct,
            grid_spec=pltpu.PrefetchScalarGridSpec(
                num_scalar_prefetch=0,
                grid=(steps,),
                in_specs=[data_spec, data_spec],
                out_specs=out_spec,
                scratch_shapes=[pltpu.VMEM((tb, 128), jnp.float32)],
            ),
            compiler_params=compiler_params,
        )(pred_t, label_t)
        # row count is a compile-time constant in the unmasked case
        return sums[0, 0] / jnp.float32(r)

    # row mask streamed as int8 (1 B/row); cast to f32 inside the kernel
    mask = have_label.reshape(-1).astype(jnp.int8)
    if r128 != r:
        mask = jnp.pad(mask, ((0, r128 - r),))
    mask = mask.reshape(nb, 128)

    kernel = functools.partial(_ce_kernel_masked, total_rows=r, tb=tb)
    sums, cnts = pl.pallas_call(
        kernel,
        out_shape=(out_struct, out_struct),
        grid_spec=pltpu.PrefetchScalarGridSpec(
            num_scalar_prefetch=0,
            grid=(steps,),
            in_specs=[data_spec, data_spec,
                      pl.BlockSpec((tb, 128), lambda i: (i, 0))],
            out_specs=(out_spec, out_spec),
            scratch_shapes=[pltpu.VMEM((tb, 128), jnp.float32),   # per-row loss sums
                            pltpu.VMEM((tb, 128), jnp.float32)],  # per-row mask counts
        ),
        compiler_params=compiler_params,
    )(pred_t, label_t, mask)
    # NOTE: if have_label is all False this is 0/0 -> NaN, matching PyTorch's
    # mean over an empty boolean-indexed tensor.
    return sums[0, 0] / cnts[0, 0]


def _ref_loss(pred, label, have_label=None):
    """Pure-JAX reference (mirrors nn.CrossEntropyLoss with probability targets)."""
    pred2 = pred.reshape(-1, C).astype(jnp.float32)
    label2 = label.reshape(-1, C).astype(jnp.float32)
    logp = jax.nn.log_softmax(pred2, axis=-1)
    per_row = -jnp.sum(label2 * logp, axis=-1)
    if have_label is None:
        return jnp.mean(per_row)
    m = have_label.reshape(-1).astype(jnp.float32)
    return jnp.sum(per_row * m) / jnp.sum(m)


if __name__ == "__main__":
    key = jax.random.PRNGKey(0)
    k1, k2, k3, k4, k5, k6 = jax.random.split(key, 6)

    # Small demo consistent with the module: (B, N, 3) logits + soft targets.
    B, N = 2, 16
    pred = jax.random.normal(k1, (B, N, C), dtype=jnp.float32)
    label = jax.nn.softmax(
        jax.random.normal(k2, (B, N, C), dtype=jnp.float32), axis=-1)
    have_label = jax.random.bernoulli(k3, p=0.6, shape=(B, N))

    loss_masked = jax.block_until_ready(
        per_level_cross_entropy_loss(pred, label, have_label))
    loss_full = jax.block_until_ready(
        per_level_cross_entropy_loss(pred, label, None))

    ref_masked = _ref_loss(pred, label, have_label)
    ref_full = _ref_loss(pred, label, None)
    assert jnp.allclose(loss_masked, ref_masked, atol=1e-5, rtol=1e-5), (
        loss_masked, ref_masked)
    assert jnp.allclose(loss_full, ref_full, atol=1e-5, rtol=1e-5), (
        loss_full, ref_full)

    # Second check: multi-step grid + ragged tail (partial last block) path.
    R2 = 5000
    pred_b = jax.random.normal(k4, (R2, C), dtype=jnp.float32)
    label_b = jax.nn.softmax(
        jax.random.normal(k5, (R2, C), dtype=jnp.float32), axis=-1)
    have_b = jax.random.bernoulli(k6, p=0.5, shape=(R2,))

    lm = jax.block_until_ready(
        per_level_cross_entropy_loss(pred_b, label_b, have_b, block_sublanes=32))
    lf = jax.block_until_ready(
        per_level_cross_entropy_loss(pred_b, label_b, None, block_sublanes=32))
    assert jnp.allclose(lm, _ref_loss(pred_b, label_b, have_b),
                        atol=1e-5, rtol=1e-4), (lm, _ref_loss(pred_b, label_b, have_b))
    assert jnp.allclose(lf, _ref_loss(pred_b, label_b, None),
                        atol=1e-5, rtol=1e-4), (lf, _ref_loss(pred_b, label_b, None))

    print("KERNEL_OK")
</pallas_src>

<mosaic_0001>
module attributes {stable_mosaic.version = 11 : i64} {
  func.func @_ce_kernel_masked(%arg0: i32, %arg1: memref<3x1x128xf32, #tpu.memory_space<vmem>>, %arg2: memref<3x1x128xf32, #tpu.memory_space<vmem>>, %arg3: memref<1x128xi8, #tpu.memory_space<vmem>>, %arg4: memref<8x128xf32, #tpu.memory_space<vmem>>, %arg5: memref<8x128xf32, #tpu.memory_space<vmem>>, %arg6: memref<1x128xf32, #tpu.memory_space<vmem>>, %arg7: memref<1x128xf32, #tpu.memory_space<vmem>>) attributes {dimension_semantics = [#tpu.dimension_semantics<arbitrary>], iteration_bounds = array<i64: 1>, scalar_prefetch = 0 : i64, scratch_operands = 2 : i64, tpu.core_type = #tpu.core_type<tc>, window_params = [{transform_indices = @transform_0, window_bounds = array<i64: 3, 1, 128>}, {transform_indices = @transform_1, window_bounds = array<i64: 3, 1, 128>}, {transform_indices = @transform_2, window_bounds = array<i64: 1, 128>}, {pipeline_mode = #tpu.pipeline_mode<synchronous>, transform_indices = @transform_3, window_bounds = array<i64: 8, 128>}, {pipeline_mode = #tpu.pipeline_mode<synchronous>, transform_indices = @transform_4, window_bounds = array<i64: 8, 128>}]} {
    %c0_i32 = arith.constant 0 : i32
    %0 = arith.cmpi eq, %arg0, %c0_i32 : i32
    %1 = arith.extui %0 : i1 to i32
    %c0_i32_0 = arith.constant 0 : i32
    %2 = arith.cmpi ne, %1, %c0_i32_0 : i32
    scf.if %2 {
      %cst_19 = arith.constant 0.000000e+00 : f32
      %64 = vector.broadcast %cst_19 : f32 to vector<1x128xf32>
      %c0_20 = arith.constant 0 : index
      %c0_21 = arith.constant 0 : index
      %65 = vector.load %arg6[%c0_20, %c0_21] : memref<1x128xf32, #tpu.memory_space<vmem>>, vector<1x128xf32>
      tpu.vector_store %arg6[%c0_20, %c0_21], %64 {strides = array<i32>} : memref<1x128xf32, #tpu.memory_space<vmem>>, vector<1x128xf32>,
      %cst_22 = arith.constant 0.000000e+00 : f32
      %66 = vector.broadcast %cst_22 : f32 to vector<1x128xf32>
      %c0_23 = arith.constant 0 : index
      %c0_24 = arith.constant 0 : index
      %67 = vector.load %arg7[%c0_23, %c0_24] : memref<1x128xf32, #tpu.memory_space<vmem>>, vector<1x128xf32>
      tpu.vector_store %arg7[%c0_23, %c0_24], %66 {strides = array<i32>} : memref<1x128xf32, #tpu.memory_space<vmem>>, vector<1x128xf32>,
    } else {
    }
    %c0 = arith.constant 0 : index
    %c0_1 = arith.constant 0 : index
    %c0_2 = arith.constant 0 : index
    %3 = vector.load %arg1[%c0, %c0_1, %c0_2] : memref<3x1x128xf32, #tpu.memory_space<vmem>>, vector<3x1x128xf32>
    %c0_3 = arith.constant 0 : index
    %c0_4 = arith.constant 0 : index
    %c0_5 = arith.constant 0 : index
    %4 = vector.load %arg2[%c0_3, %c0_4, %c0_5] : memref<3x1x128xf32, #tpu.memory_space<vmem>>, vector<3x1x128xf32>
    %c0_6 = arith.constant 0 : index
    %c0_7 = arith.constant 0 : index
    %5 = vector.load %arg3[%c0_6, %c0_7] : memref<1x128xi8, #tpu.memory_space<vmem>>, vector<1x128xi8>
    %6 = arith.sitofp %5 : vector<1x128xi8> to vector<1x128xf32>
    %7 = vector.extract_strided_slice %3 {offsets = [0, 0, 0], sizes = [1, 1, 128], strides = [1, 1, 1]} : vector<3x1x128xf32> to vector<1x1x128xf32>
    %8 = vector.shape_cast %7 : vector<1x1x128xf32> to vector<1x128xf32>
    %9 = vector.extract_strided_slice %3 {offsets = [1, 0, 0], sizes = [1, 1, 128], strides = [1, 1, 1]} : vector<3x1x128xf32> to vector<1x1x128xf32>
    %10 = vector.shape_cast %9 : vector<1x1x128xf32> to vector<1x128xf32>
    %11 = vector.extract_strided_slice %3 {offsets = [2, 0, 0], sizes = [1, 1, 128], strides = [1, 1, 1]} : vector<3x1x128xf32> to vector<1x1x128xf32>
    %12 = vector.shape_cast %11 : vector<1x1x128xf32> to vector<1x128xf32>
    %13 = vector.extract_strided_slice %4 {offsets = [0, 0, 0], sizes = [1, 1, 128], strides = [1, 1, 1]} : vector<3x1x128xf32> to vector<1x1x128xf32>
    %14 = vector.shape_cast %13 : vector<1x1x128xf32> to vector<1x128xf32>
    %15 = vector.extract_strided_slice %4 {offsets = [1, 0, 0], sizes = [1, 1, 128], strides = [1, 1, 1]} : vector<3x1x128xf32> to vector<1x1x128xf32>
    %16 = vector.shape_cast %15 : vector<1x1x128xf32> to vector<1x128xf32>
    %17 = vector.extract_strided_slice %4 {offsets = [2, 0, 0], sizes = [1, 1, 128], strides = [1, 1, 1]} : vector<3x1x128xf32> to vector<1x1x128xf32>
    %18 = vector.shape_cast %17 : vector<1x1x128xf32> to vector<1x128xf32>
    %19 = arith.maximumf %8, %10 : vector<1x128xf32>
    %20 = arith.maximumf %19, %12 : vector<1x128xf32>
    %21 = arith.subf %8, %20 : vector<1x128xf32>
    %22 = math.exp %21 : vector<1x128xf32>
    %23 = arith.subf %10, %20 : vector<1x128xf32>
    %24 = math.exp %23 : vector<1x128xf32>
    %25 = arith.addf %22, %24 : vector<1x128xf32>
    %26 = arith.subf %12, %20 : vector<1x128xf32>
    %27 = math.exp %26 : vector<1x128xf32>
    %28 = arith.addf %25, %27 : vector<1x128xf32>
    %29 = math.log %28 : vector<1x128xf32>
    %30 = arith.addf %29, %20 : vector<1x128xf32>
    %31 = arith.addf %14, %16 : vector<1x128xf32>
    %32 = arith.addf %31, %18 : vector<1x128xf32>
    %33 = arith.mulf %14, %8 : vector<1x128xf32>
    %34 = arith.mulf %16, %10 : vector<1x128xf32>
    %35 = arith.addf %33, %34 : vector<1x128xf32>
    %36 = arith.mulf %18, %12 : vector<1x128xf32>
    %37 = arith.addf %35, %36 : vector<1x128xf32>
    %38 = tpu.iota {dimensions = array<i32: 0>} : vector<1x128xi32>
    %c1_i32 = arith.constant 1 : i32
    %39 = arith.muli %arg0, %c1_i32 : i32
    %40 = vector.broadcast %39 : i32 to vector<1x128xi32>
    %41 = arith.addi %38, %40 : vector<1x128xi32>
    %42 = tpu.iota {dimensions = array<i32: 1>} : vector<1x128xi32>
    %c128_i32 = arith.constant 128 : i32
    %43 = vector.broadcast %c128_i32 : i32 to vector<1x128xi32>
    %44 = arith.muli %41, %43 : vector<1x128xi32>
    %45 = arith.addi %44, %42 : vector<1x128xi32>
    %c32_i32 = arith.constant 32 : i32
    %46 = vector.broadcast %c32_i32 : i32 to vector<1x128xi32>
    %47 = arith.cmpi slt, %45, %46 : vector<1x128xi32>
    %48 = arith.mulf %30, %32 : vector<1x128xf32>
    %49 = arith.subf %48, %37 : vector<1x128xf32>
    %50 = arith.mulf %6, %49 : vector<1x128xf32>
    %c0_8 = arith.constant 0 : index
    %c0_9 = arith.constant 0 : index
    %51 = vector.load %arg6[%c0_8, %c0_9] : memref<1x128xf32, #tpu.memory_space<vmem>>, vector<1x128xf32>
    %cst = arith.constant 0.000000e+00 : f32
    %52 = vector.broadcast %cst : f32 to vector<1x128xf32>
    %53 = arith.select %47, %50, %52 : vector<1x128xi1>, vector<1x128xf32>
    %54 = arith.addf %51, %53 : vector<1x128xf32>
    %c0_10 = arith.constant 0 : index
    %c0_11 = arith.constant 0 : index
    %55 = vector.load %arg6[%c0_10, %c0_11] : memref<1x128xf32, #tpu.memory_space<vmem>>, vector<1x128xf32>
    tpu.vector_store %arg6[%c0_10, %c0_11], %54 {strides = array<i32>} : memref<1x128xf32, #tpu.memory_space<vmem>>, vector<1x128xf32>,
    %c0_12 = arith.constant 0 : index
    %c0_13 = arith.constant 0 : index
    %56 = vector.load %arg7[%c0_12, %c0_13] : memref<1x128xf32, #tpu.memory_space<vmem>>, vector<1x128xf32>
    %cst_14 = arith.constant 0.000000e+00 : f32
    %57 = vector.broadcast %cst_14 : f32 to vector<1x128xf32>
    %58 = arith.select %47, %6, %57 : vector<1x128xi1>, vector<1x128xf32>
    %59 = arith.addf %56, %58 : vector<1x128xf32>
    %c0_15 = arith.constant 0 : index
    %c0_16 = arith.constant 0 : index
    %60 = vector.load %arg7[%c0_15, %c0_16] : memref<1x128xf32, #tpu.memory_space<vmem>>, vector<1x128xf32>
    tpu.vector_store %arg7[%c0_15, %c0_16], %59 {strides = array<i32>} : memref<1x128xf32, #tpu.memory_space<vmem>>, vector<1x128xf32>,
    %c0_i32_17 = arith.constant 0 : i32
    %61 = arith.cmpi eq, %arg0, %c0_i32_17 : i32
    %62 = arith.extui %61 : i1 to i32
    %c0_i32_18 = arith.constant 0 : i32
    %63 = arith.cmpi ne, %62, %c0_i32_18 : i32
    scf.if %63 {
      %c0_19 = arith.constant 0 : index
      %c0_20 = arith.constant 0 : index
      %64 = vector.load %arg6[%c0_19, %c0_20] : memref<1x128xf32, #tpu.memory_space<vmem>>, vector<1x128xf32>
      %65 = vector.shape_cast %64 : vector<1x128xf32> to vector<1x1x128xf32>
      %cst_21 = arith.constant dense<0.000000e+00> : vector<1xf32>
      %66 = vector.multi_reduction <add>, %65, %cst_21 [1, 2] : vector<1x1x128xf32> to vector<1xf32>
      %67 = vector.shape_cast %66 : vector<1xf32> to vector<1x1x1xf32>
      %68 = vector.extract %67[0, 0, 0] : f32 from vector<1x1x1xf32>
      %69 = vector.broadcast %68 : f32 to vector<8x128xf32>
      %c0_22 = arith.constant 0 : index
      %c0_23 = arith.constant 0 : index
      %70 = vector.load %arg4[%c0_22, %c0_23] : memref<8x128xf32, #tpu.memory_space<vmem>>, vector<8x128xf32>
      tpu.vector_store %arg4[%c0_22, %c0_23], %69 {strides = array<i32>} : memref<8x128xf32, #tpu.memory_space<vmem>>, vector<8x128xf32>,
      %c0_24 = arith.constant 0 : index
      %c0_25 = arith.constant 0 : index
      %71 = vector.load %arg7[%c0_24, %c0_25] : memref<1x128xf32, #tpu.memory_space<vmem>>, vector<1x128xf32>
      %72 = vector.shape_cast %71 : vector<1x128xf32> to vector<1x1x128xf32>
      %cst_26 = arith.constant dense<0.000000e+00> : vector<1xf32>
      %73 = vector.multi_reduction <add>, %72, %cst_26 [1, 2] : vector<1x1x128xf32> to vector<1xf32>
      %74 = vector.shape_cast %73 : vector<1xf32> to vector<1x1x1xf32>
      %75 = vector.extract %74[0, 0, 0] : f32 from vector<1x1x1xf32>
      %76 = vector.broadcast %75 : f32 to vector<8x128xf32>
      %c0_27 = arith.constant 0 : index
      %c0_28 = arith.constant 0 : index
      %77 = vector.load %arg5[%c0_27, %c0_28] : memref<8x128xf32, #tpu.memory_space<vmem>>, vector<8x128xf32>
      tpu.vector_store %arg5[%c0_27, %c0_28], %76 {strides = array<i32>} : memref<8x128xf32, #tpu.memory_space<vmem>>, vector<8x128xf32>,
    } else {
    }
    return
  }
  func.func @transform_0(%arg0: i32) -> (i32, i32, i32) {
    %c0_i32 = arith.constant 0 : i32
    %c0_i32_0 = arith.constant 0 : i32
    %c0_i32_1 = arith.constant 0 : i32
    return %c0_i32, %arg0, %c0_i32_0 : i32, i32, i32
  }
  func.func @transform_1(%arg0: i32) -> (i32, i32, i32) {
    %c0_i32 = arith.constant 0 : i32
    %c0_i32_0 = arith.constant 0 : i32
    %c0_i32_1 = arith.constant 0 : i32
    return %c0_i32, %arg0, %c0_i32_0 : i32, i32, i32
  }
  func.func @transform_2(%arg0: i32) -> (i32, i32) {
    %c0_i32 = arith.constant 0 : i32
    %c0_i32_0 = arith.constant 0 : i32
    return %arg0, %c0_i32 : i32, i32
  }
  func.func @transform_3(%arg0: i32) -> (i32, i32) {
    %c0_i32 = arith.constant 0 : i32
    %c0_i32_0 = arith.constant 0 : i32
    %c0_i32_1 = arith.constant 0 : i32
    return %c0_i32, %c0_i32_0 : i32, i32
  }
  func.func @transform_4(%arg0: i32) -> (i32, i32) {
    %c0_i32 = arith.constant 0 : i32
    %c0_i32_0 = arith.constant 0 : i32
    %c0_i32_1 = arith.constant 0 : i32
    return %c0_i32, %c0_i32_0 : i32, i32
  }
}

</mosaic_0001>

<llo_original>
// kernel: tpu_custom_call.1
$region0: #{tpu_custom_call.1}
  #allocation0 [shape = 'u32[]', space=smem, size = 0x4, offset = 0x4, fixed_abs, tag = 'smem constant byte address 0x4 - core index']
  #allocation1 [shape = 'u32[144,128]{1,0:T(1,128)}', space=vmem, size = 0x12000, scoped, tag = 'internal scratch']
  #allocation2 [shape = 'f32[1,128]{1,0:T(1,128)}', space=vmem, size = 0x200, scoped, tag = 'scratch operand']
  #allocation3 [shape = 'f32[1,128]{1,0:T(1,128)}', space=vmem, size = 0x200, scoped, tag = 'scratch operand']
  %s0 = inlined_call_operand.hbm [shape: f32[3,1,128], index: 0, kind: input, shape index: {}]
  %s1 = inlined_call_operand.vmem [shape: f32[3,1,128], index: 1, kind: input, shape index: {}]
  %s2 = inlined_call_operand.vmem [shape: s8[1,128], index: 2, kind: input, shape index: {}]
  %s3 = inlined_call_operand.hbm [shape: f32[8,128], index: 3, kind: output, shape index: {0}]
  %s4 = inlined_call_operand.hbm [shape: f32[8,128], index: 4, kind: output, shape index: {1}]
  %5 = xla_tuple %s3, %s4
  %s6 = sld [smem:[#allocation0]]
  $region42: #{tpu_custom_call.1} parent=0
    _
  %s8 = ssub.s32 1, %s6
  %s9 = scalar_select 0, %s8, %s6
  $region1: #{tpu_custom_call.1} parent=0
    #allocation4 [shape = 'u8[1536]{0}', space=vmem, size = 0x800, scoped, tag = 'input window, operand 0, single buffered']
    #allocation5 [shape = 's32[1]{0}', space=sflag, size = 0x4, scoped, tag = 'scoped memory for tpu_custom_call.1']
    #allocation6 [shape = 's32[1]{0}', space=sflag, size = 0x4, scoped, tag = 'scoped memory for tpu_custom_call.1']
    #allocation7 [shape = 'u8[4096]{0}', space=vmem, size = 0x1000, scoped, tag = 'output window, operand 0, single buffered']
    #allocation8 [shape = 'u8[4096]{0}', space=vmem, size = 0x1000, scoped, tag = 'output window, operand 1, single buffered']
    #allocation9 [shape = 's32[1]{0}', space=sflag, size = 0x4, scoped, tag = 'scoped memory for tpu_custom_call.1']
    %10 = vsyncpa [#allocation5], 0
    %11 = vsyncpa [#allocation6], 0
    %12 = vsyncpa [#allocation9], 0
    // Predicated region
    $region2: #{tpu_custom_call.1} parent=1 // pred_check
      _
    $region3: #{tpu_custom_call.1} parent=1 // pred_check_branch
      %14 = sbr.rel (0) target = $region5
    $region4: #{tpu_custom_call.1} parent=1 // pred_region
      %s16 = ssub.s32 48, 48
      %17 = vsyncadd [#allocation5], %s16
      %s18 = sshll.u32 [#allocation4], 4
      %s19 = int_to_ptr.vmem [resolvable:$true] %s18
      %24 = dma.hbm_to_vmem [thread:$0]  %s0, 48, %s19, [#allocation5], 16, 16, 1
    $region5: #{tpu_custom_call.1} parent=1 // pred_fallthru
      _
    // Predicated region
    $region6: #{tpu_custom_call.1} parent=1 // pred_check
      _
    $region7: #{tpu_custom_call.1} parent=1 // pred_check_branch
      %26 = sbr.rel (0) target = $region9
    $region8: #{tpu_custom_call.1} parent=1 // pred_region
      _
    $region9: #{tpu_custom_call.1} parent=1 // pred_fallthru
      _
    // Predicated region
    $region10: #{tpu_custom_call.1} parent=1 // pred_check
      _
    $region11: #{tpu_custom_call.1} parent=1 // pred_check_branch
      %28 = sbr.rel (0) target = $region13
    $region12: #{tpu_custom_call.1} parent=1 // pred_region
      _
    $region13: #{tpu_custom_call.1} parent=1 // pred_fallthru
      _
    // Predicated region
    $region14: #{tpu_custom_call.1} parent=1 // pred_check
      _
    $region15: #{tpu_custom_call.1} parent=1 // pred_check_branch
      %30 = sbr.rel (0) target = $region17
    $region16: #{tpu_custom_call.1} parent=1 // pred_region
      %31 = dma.done [#allocation5], 48
    $region17: #{tpu_custom_call.1} parent=1 // pred_fallthru
      _
    %p32 = scmp.eq.s32.totalorder 0, 0
    // Predicated region
    $region18: #{tpu_custom_call.1} parent=1 // pred_check
      %p33 = pneg %p32
    $region19: #{tpu_custom_call.1} parent=1 // pred_check_branch
      %35 = sbr.rel (%p33) target = $region21
    $region20: #{tpu_custom_call.1} parent=1 // pred_region
      %36 = vst [vmem:[#allocation2] sm:$0x1] 0.0
      %37 = vst [vmem:[#allocation3] sm:$0x1] 0.0
    $region21: #{tpu_custom_call.1} parent=1 // pred_fallthru
      _
    %v38 = vld [vmem:[#allocation4] sm:$0x1]
    %v39 = vld [vmem:[#allocation4 + $0x1] sm:$0x1]
    %v40 = vld [vmem:[#allocation4 + $0x2] sm:$0x1]
    %v41 = vld [vmem:[%s1] sm:$0x1]
    %v42 = vld [vmem:[%s1 + $0x1] sm:$0x1]
    %v43 = vld [vmem:[%s1 + $0x2] sm:$0x1]
    %v44 = vld [vmem:[%s2] sm:$0x1]
    %v45 = vunpack.c.0.s8 %v44
    %v46 = vcvt.s32.f32 %v45
    %v47 = vmax.f32 %v38, %v39
    %v48 = vmax.f32 %v47, %v40
    %v49 = vsub.f32 %v38, %v48
    %v50 = vmul.f32 %v49, 1.442695
    %v51 = vpow.pop %v50
    %v52 = vsub.f32 %v39, %v48
    %v53 = vmul.f32 %v52, 1.442695
    %v54 = vpow.pop %v53
    %v55 = vadd.f32 %v51, %v54
    %v56 = vsub.f32 %v40, %v48
    %v57 = vmul.f32 %v56, 1.442695
    %v58 = vpow.pop %v57
    %v59 = vadd.f32 %v55, %v58
    %v60 = vlog2.pop %v59
    %v61 = vmul.f32 %v60, 0.6931472
    %v62 = vadd.f32 %v61, %v48
    %v63 = vadd.f32 %v41, %v42
    %v64 = vadd.f32 %v63, %v43
    %v65 = vmul.f32 %v41, %v38
    %v66 = vmul.f32 %v42, %v39
    %v67 = vadd.f32 %v65, %v66
    %v68 = vmul.f32 %v43, %v40
    %v69 = vadd.f32 %v67, %v68
    %v70 = vlaneseq
    %v71 = vshrl.u32 %v70, 7
    %v72 = vstv 0
    %v73 = vadd.s32 %v71, %v72
    %v74 = vlaneseq
    %v75 = vand.u32 %v74, 127
    %v76 = vmul.u32 %v73, 128
    %v77 = vadd.s32 %v76, %v75
    %vm78 = vcmp.lt.s32.totalorder %v77, 32
    %v79 = vmul.f32 %v62, %v64
    %v80 = vsub.f32 %v79, %v69
    %v81 = vmul.f32 %v46, %v80
    %v82 = vld [vmem:[#allocation2] sm:$0x1]
    %v83 = vsel %vm78, %v81, 0.0
    %v84 = vadd.f32 %v82, %v83
    %85 = vst [vmem:[#allocation2] sm:$0x1] %v84
    %v86 = vld [vmem:[#allocation3] sm:$0x1]
    %v87 = vsel %vm78, %v46, 0.0
    %v88 = vadd.f32 %v86, %v87
    %89 = vst [vmem:[#allocation3] sm:$0x1] %v88
    // Predicated region
    $region22: #{tpu_custom_call.1} parent=1 // pred_check
      %p90 = pneg %p32
    $region23: #{tpu_custom_call.1} parent=1 // pred_check_branch
      %92 = sbr.rel (%p90) target = $region25
    $region24: #{tpu_custom_call.1} parent=1 // pred_region
      %v93 = vld [vmem:[#allocation2] sm:$0x1]
      %vm94 = vcmask 1040384
      %v95 = vsel %vm94, %v93, 0.0
      %96 = vadd.xlane.f32.xlu0 %v95
      %v97 = vpop.xlane.xlu0 %96
      %v98 = vrot.slane %v97, 4
      %v99 = vadd.f32 %v97, %v98
      %v100 = vrot.slane %v99, 2
      %v101 = vadd.f32 %v99, %v100
      %v102 = vrot.slane %v101, 1
      %v103 = vadd.f32 %v101, %v102
      %s104 = vtos %v103
      %v105 = vstv %s104
      %106 = vst [vmem:[#allocation7] sm:$0xff] %v105
      %v107 = vld [vmem:[#allocation3] sm:$0x1]
      %v108 = vsel %vm94, %v107, 0.0
      %109 = vadd.xlane.f32.xlu0 %v108
      %v110 = vpop.xlane.xlu0 %109
      %v111 = vrot.slane %v110, 4
      %v112 = vadd.f32 %v110, %v111
      %v113 = vrot.slane %v112, 2
      %v114 = vadd.f32 %v112, %v113
      %v115 = vrot.slane %v114, 1
      %v116 = vadd.f32 %v114, %v115
      %s117 = vtos %v116
      %v118 = vstv %s117
      %119 = vst [vmem:[#allocation8] sm:$0xff] %v118
    $region25: #{tpu_custom_call.1} parent=1 // pred_fallthru
      _
    // Predicated region
    $region26: #{tpu_custom_call.1} parent=1 // pred_check
      _
    $region27: #{tpu_custom_call.1} parent=1 // pred_check_branch
      %121 = sbr.rel (0) target = $region29
    $region28: #{tpu_custom_call.1} parent=1 // pred_region
      %s123 = ssub.s32 128, 128
      %124 = vsyncadd [#allocation6], %s123
      %s126 = sshll.u32 [#allocation7], 4
      %s127 = int_to_ptr.vmem [resolvable:$true] %s126
      %129 = dma.vmem_to_hbm [thread:$0]  %s127, 128, %s3, [#allocation6]
    $region29: #{tpu_custom_call.1} parent=1 // pred_fallthru
      _
    // Predicated region
    $region30: #{tpu_custom_call.1} parent=1 // pred_check
      _
    $region31: #{tpu_custom_call.1} parent=1 // pred_check_branch
      %131 = sbr.rel (0) target = $region33
    $region32: #{tpu_custom_call.1} parent=1 // pred_region
      %s133 = ssub.s32 128, 128
      %134 = vsyncadd [#allocation9], %s133
      %s136 = sshll.u32 [#allocation8], 4
      %s137 = int_to_ptr.vmem [resolvable:$true] %s136
      %139 = dma.vmem_to_hbm [thread:$0]  %s137, 128, %s4, [#allocation9]
    $region33: #{tpu_custom_call.1} parent=1 // pred_fallthru
      _
    // Predicated region
    $region34: #{tpu_custom_call.1} parent=1 // pred_check
      _
    $region35: #{tpu_custom_call.1} parent=1 // pred_check_branch
      %141 = sbr.rel (0) target = $region37
    $region36: #{tpu_custom_call.1} parent=1 // pred_region
      %142 = dma.done [#allocation6], 128
    $region37: #{tpu_custom_call.1} parent=1 // pred_fallthru
      _
    // Predicated region
    $region38: #{tpu_custom_call.1} parent=1 // pred_check
      _
    $region39: #{tpu_custom_call.1} parent=1 // pred_check_branch
      %144 = sbr.rel (0) target = $region41
    $region40: #{tpu_custom_call.1} parent=1 // pred_region
      %145 = dma.done [#allocation9], 128
    $region41: #{tpu_custom_call.1} parent=1 // pred_fallthru
      _
    %146 = vsyncpa [#allocation5], 1
    %147 = vsyncpa [#allocation6], 1
    %148 = vsyncpa [#allocation9], 1

</llo_original>
